<compile_context>
chip_gen: v7x
topology: tpu7x:2x2x1
jax: 0.10.0
libtpu: 0.0.40
codegen_flags: <defaults>
</compile_context>

<pallas_src>
import math

import jax
import jax.numpy as jnp
from jax.experimental import pallas as pl
from jax.experimental.pallas import tpu as pltpu

# Largest lane tile we ever use (128K lanes).  Actual tile is derived per call
# from the problem size and a per-block VMEM byte budget so it also fits the
# smaller v7x / v5e scoped-VMEM defaults with double buffering + scratch.
_MAX_TILE_LANES = 128 * 1024
_BLOCK_BYTE_BUDGET = 4 * 1024 * 1024  # per input block (double-buffered by Pallas)


def _choose_tile(batch: int, depth: int) -> int:
    """Pick a lane tile: multiple of 128, big enough to amortize grid-step
    overhead, small enough that (2 x in-block + scratch) stays well inside
    scoped VMEM on every TPU generation."""
    d_pad128 = pl.cdiv(depth, 128) * 128
    by_budget = max(128, (_BLOCK_BYTE_BUDGET // (batch * 4)) // 128 * 128)
    return int(min(d_pad128, by_budget, _MAX_TILE_LANES))


def _gp_sumsq_kernel(g_ref, out_ref, acc_ref):
    """Accumulate per-sample, per-lane partial sums of squares; reduce across
    lanes only on the final grid step."""
    t = pl.program_id(0)

    @pl.when(t == 0)
    def _():
        acc_ref[...] = jnp.zeros_like(acc_ref)

    g = g_ref[...].astype(jnp.float32)          # [B, TILE], one dense VPU pass
    acc_ref[...] += g * g

    @pl.when(t == pl.num_programs(0) - 1)
    def _():
        out_ref[...] = jnp.sum(acc_ref[...], axis=1, keepdims=True)   # [B, 1]


def gradient_penalty_from_grads(grad_interp):
    """Given d(critic)/d(interp) with shape [B, ...], return
    mean((||grad||_2 - 1)^2) exactly like the PyTorch module."""
    B = grad_interp.shape[0]
    D = int(math.prod(grad_interp.shape[1:]))

    g = grad_interp.reshape(B, D)
    if g.dtype != jnp.float32:
        g = g.astype(jnp.float32)               # only cast if needed (no extra pass)

    tile = _choose_tile(B, D)
    d_pad = pl.cdiv(D, tile) * tile
    if d_pad != D:                              # zero padding: no effect on sum(g^2)
        g = jnp.pad(g, ((0, 0), (0, d_pad - D)))

    grid = (d_pad // tile,)
    ssq = pl.pallas_call(
        _gp_sumsq_kernel,
        out_shape=jax.ShapeDtypeStruct((B, 1), jnp.float32),
        grid_spec=pltpu.PrefetchScalarGridSpec(
            num_scalar_prefetch=0,
            grid=grid,
            in_specs=[pl.BlockSpec((B, tile), lambda t: (0, t))],
            out_specs=pl.BlockSpec((B, 1), lambda t: (0, 0)),
            scratch_shapes=[pltpu.VMEM((B, tile), jnp.float32)],
        ),
        compiler_params=pltpu.CompilerParams(
            dimension_semantics=("arbitrary",)),   # reduction axis
    )(g)

    norm = jnp.sqrt(ssq[:, 0])                  # tiny [B] epilogue in plain JAX
    return jnp.mean((norm - 1.0) ** 2)          # jnp scalar (jit-safe, no float())


def gradient_penalty_loss(critic_fn, interp):
    """Functional equivalent of GradientPenaltyLoss.forward(interp, interp_crit).

    PyTorch differentiates a pre-built graph; JAX needs the critic *function*,
    so the caller passes `critic_fn` and we rebuild grad_interp with jax.vjp
    using an all-ones cotangent (== grad_outputs filled with 1.0)."""
    # TODO(synk): torch.autograd.grad on an existing graph has no Pallas (or
    # array-level JAX) equivalent; the backward pass is done here with jax.vjp.
    crit, vjp_fn = jax.vjp(critic_fn, interp)
    grad_interp = vjp_fn(jnp.ones_like(crit))[0]
    return gradient_penalty_from_grads(grad_interp)


def gradient_penalty_ref(grad_interp):
    """Pure-JAX reference mirroring the PyTorch module (post-autograd part)."""
    g = grad_interp.reshape(grad_interp.shape[0], -1)
    norm = jnp.sqrt(jnp.sum(g * g, axis=1))
    return jnp.mean((norm - 1.0) ** 2)


if __name__ == "__main__":
    key = jax.random.PRNGKey(0)
    B, C, H, W = 2, 4, 16, 16

    k1, k2 = jax.random.split(key)
    interp = jax.random.normal(k1, (B, C, H, W), jnp.float32)

    # Small deterministic "critic": per-sample scalar, differentiable.
    w = 0.05 * jax.random.normal(k2, (C * H * W,), jnp.float32)

    def critic_fn(x):                            # [B, C, H, W] -> [B]
        xf = x.reshape(x.shape[0], -1)
        return jnp.tanh(xf @ w) + 0.1 * jnp.sum(xf * xf, axis=1)

    # Full module path: autograd (jax.vjp) + Pallas reduction kernel.
    loss = gradient_penalty_loss(critic_fn, interp)
    loss = jax.block_until_ready(loss)

    # Reference check against the same autograd gradients.
    _, vjp_fn = jax.vjp(critic_fn, interp)
    grad_interp = vjp_fn(jnp.ones((B,), jnp.float32))[0]
    loss_ref = gradient_penalty_ref(grad_interp)

    err = abs(float(loss) - float(loss_ref))
    assert err <= 1e-5 * max(1.0, abs(float(loss_ref))), (float(loss), float(loss_ref))

    # Also exercise the kernel on a larger, multi-grid-step problem.
    big = jax.random.normal(jax.random.PRNGKey(1), (2, 3 * 512 * 512), jnp.float32)
    loss_big = jax.block_until_ready(gradient_penalty_from_grads(big))
    loss_big_ref = gradient_penalty_ref(big)
    assert abs(float(loss_big) - float(loss_big_ref)) <= \
        1e-4 * max(1.0, abs(float(loss_big_ref))), (float(loss_big), float(loss_big_ref))

    print("KERNEL_OK")
</pallas_src>

<mosaic_0001>
module attributes {stable_mosaic.version = 11 : i64} {
  func.func @_gp_sumsq_kernel(%arg0: i32, %arg1: memref<2x1024xf32, #tpu.memory_space<vmem>>, %arg2: memref<2x1xf32, #tpu.memory_space<vmem>>, %arg3: memref<2x1024xf32, #tpu.memory_space<vmem>>) attributes {dimension_semantics = [#tpu.dimension_semantics<arbitrary>], iteration_bounds = array<i64: 1>, scalar_prefetch = 0 : i64, scratch_operands = 1 : i64, tpu.core_type = #tpu.core_type<tc>, window_params = [{transform_indices = @transform_0, window_bounds = array<i64: 2, 1024>}, {pipeline_mode = #tpu.pipeline_mode<synchronous>, transform_indices = @transform_1, window_bounds = array<i64: 2, 1>}]} {
    %c0_i32 = arith.constant 0 : i32
    %0 = arith.cmpi eq, %arg0, %c0_i32 : i32
    %1 = arith.extui %0 : i1 to i32
    %c0_i32_0 = arith.constant 0 : i32
    %2 = arith.cmpi ne, %1, %c0_i32_0 : i32
    scf.if %2 {
      %cst = arith.constant 0.000000e+00 : f32
      %11 = vector.broadcast %cst : f32 to vector<2x1024xf32>
      %c0_8 = arith.constant 0 : index
      %c0_9 = arith.constant 0 : index
      %12 = vector.load %arg3[%c0_8, %c0_9] : memref<2x1024xf32, #tpu.memory_space<vmem>>, vector<2x1024xf32>
      tpu.vector_store %arg3[%c0_8, %c0_9], %11 {strides = array<i32>} : memref<2x1024xf32, #tpu.memory_space<vmem>>, vector<2x1024xf32>,
    } else {
    }
    %c0 = arith.constant 0 : index
    %c0_1 = arith.constant 0 : index
    %3 = vector.load %arg1[%c0, %c0_1] : memref<2x1024xf32, #tpu.memory_space<vmem>>, vector<2x1024xf32>
    %c0_2 = arith.constant 0 : index
    %c0_3 = arith.constant 0 : index
    %4 = vector.load %arg3[%c0_2, %c0_3] : memref<2x1024xf32, #tpu.memory_space<vmem>>, vector<2x1024xf32>
    %5 = arith.mulf %3, %3 : vector<2x1024xf32>
    %6 = arith.addf %4, %5 : vector<2x1024xf32>
    %c0_4 = arith.constant 0 : index
    %c0_5 = arith.constant 0 : index
    %7 = vector.load %arg3[%c0_4, %c0_5] : memref<2x1024xf32, #tpu.memory_space<vmem>>, vector<2x1024xf32>
    tpu.vector_store %arg3[%c0_4, %c0_5], %6 {strides = array<i32>} : memref<2x1024xf32, #tpu.memory_space<vmem>>, vector<2x1024xf32>,
    %c0_i32_6 = arith.constant 0 : i32
    %8 = arith.cmpi eq, %arg0, %c0_i32_6 : i32
    %9 = arith.extui %8 : i1 to i32
    %c0_i32_7 = arith.constant 0 : i32
    %10 = arith.cmpi ne, %9, %c0_i32_7 : i32
    scf.if %10 {
      %c0_8 = arith.constant 0 : index
      %c0_9 = arith.constant 0 : index
      %11 = vector.load %arg3[%c0_8, %c0_9] : memref<2x1024xf32, #tpu.memory_space<vmem>>, vector<2x1024xf32>
      %cst = arith.constant dense<0.000000e+00> : vector<2xf32>
      %12 = vector.multi_reduction <add>, %11, %cst [1] : vector<2x1024xf32> to vector<2xf32>
      %13 = vector.shape_cast %12 : vector<2xf32> to vector<2x1xf32>
      %c0_10 = arith.constant 0 : index
      %c0_11 = arith.constant 0 : index
      %14 = vector.load %arg2[%c0_10, %c0_11] : memref<2x1xf32, #tpu.memory_space<vmem>>, vector<2x1xf32>
      tpu.vector_store %arg2[%c0_10, %c0_11], %13 {strides = array<i32>} : memref<2x1xf32, #tpu.memory_space<vmem>>, vector<2x1xf32>,
    } else {
    }
    return
  }
  func.func @transform_0(%arg0: i32) -> (i32, i32) {
    %c0_i32 = arith.constant 0 : i32
    %c0_i32_0 = arith.constant 0 : i32
    return %c0_i32, %arg0 : i32, i32
  }
  func.func @transform_1(%arg0: i32) -> (i32, i32) {
    %c0_i32 = arith.constant 0 : i32
    %c0_i32_0 = arith.constant 0 : i32
    %c0_i32_1 = arith.constant 0 : i32
    return %c0_i32, %c0_i32_0 : i32, i32
  }
}

</mosaic_0001>

<llo_original>
// kernel: tpu_custom_call.1
$region0: #{tpu_custom_call.1}
  #allocation0 [shape = 'u32[]', space=smem, size = 0x4, offset = 0x4, fixed_abs, tag = 'smem constant byte address 0x4 - core index']
  #allocation1 [shape = 'u32[144,128]{1,0:T(1,128)}', space=vmem, size = 0x12000, scoped, tag = 'internal scratch']
  #allocation2 [shape = 'f32[2,1024]{1,0:T(2,128)}', space=vmem, size = 0x2000, scoped, tag = 'scratch operand']
  %s0 = inlined_call_operand.hbm [shape: f32[2,1024], index: 0, kind: input, shape index: {}]
  %s1 = inlined_call_operand.vmem [shape: f32[2,1], index: 1, kind: output, shape index: {}]
  %s2 = sld [smem:[#allocation0]]
  $region26: #{tpu_custom_call.1} parent=0
    _
  %s4 = ssub.s32 1, %s2
  %s5 = scalar_select 0, %s4, %s2
  $region1: #{tpu_custom_call.1} parent=0
    #allocation3 [shape = 'u8[8192]{0}', space=vmem, size = 0x2000, scoped, tag = 'input window, operand 0, single buffered']
    #allocation4 [shape = 's32[1]{0}', space=sflag, size = 0x4, scoped, tag = 'scoped memory for tpu_custom_call.1']
    %6 = vsyncpa [#allocation4], 0
    // Predicated region
    $region2: #{tpu_custom_call.1} parent=1 // pred_check
      _
    $region3: #{tpu_custom_call.1} parent=1 // pred_check_branch
      %8 = sbr.rel (0) target = $region5
    $region4: #{tpu_custom_call.1} parent=1 // pred_region
      %s10 = ssub.s32 256, 256
      %11 = vsyncadd [#allocation4], %s10
      %s13 = sshll.u32 [#allocation3], 4
      %s14 = int_to_ptr.vmem [resolvable:$true] %s13
      %16 = dma.hbm_to_vmem [thread:$0]  %s0, 256, %s14, [#allocation4]
    $region5: #{tpu_custom_call.1} parent=1 // pred_fallthru
      _
    // Predicated region
    $region6: #{tpu_custom_call.1} parent=1 // pred_check
      _
    $region7: #{tpu_custom_call.1} parent=1 // pred_check_branch
      %18 = sbr.rel (0) target = $region9
    $region8: #{tpu_custom_call.1} parent=1 // pred_region
      %19 = dma.done [#allocation4], 256
    $region9: #{tpu_custom_call.1} parent=1 // pred_fallthru
      _
    %p20 = scmp.eq.s32.totalorder 0, 0
    // Predicated region
    $region10: #{tpu_custom_call.1} parent=1 // pred_check
      %p21 = pneg %p20
    $region11: #{tpu_custom_call.1} parent=1 // pred_check_branch
      %23 = sbr.rel (%p21) target = $region13
    $region12: #{tpu_custom_call.1} parent=1 // pred_region
      %24 = vst [vmem:[#allocation2] sm:$0xff] 0.0
      %25 = vst [vmem:[#allocation2 + $0x8] sm:$0xff] 0.0
    $region13: #{tpu_custom_call.1} parent=1 // pred_fallthru
      _
    %v26 = vld [vmem:[#allocation3] sm:$0xff]
    %v27 = vld [vmem:[#allocation3 + $0x8] sm:$0xff]
    %v28 = vld [vmem:[#allocation2] sm:$0xff]
    %v29 = vld [vmem:[#allocation2 + $0x8] sm:$0xff]
    %v30 = vmul.f32 %v26, %v26
    %v31 = vmul.f32 %v27, %v27
    %v32 = vadd.f32 %v28, %v30
    %v33 = vadd.f32 %v29, %v31
    %34 = vst [vmem:[#allocation2] sm:$0xff] %v32
    %35 = vst [vmem:[#allocation2 + $0x8] sm:$0xff] %v33
    // Predicated region
    $region14: #{tpu_custom_call.1} parent=1 // pred_check
      %p36 = pneg %p20
    $region15: #{tpu_custom_call.1} parent=1 // pred_check_branch
      %38 = sbr.rel (%p36) target = $region17
    $region16: #{tpu_custom_call.1} parent=1 // pred_region
      %v39 = vld [vmem:[#allocation2] sm:$0xff]
      %v40 = vld [vmem:[#allocation2 + $0x8] sm:$0xff]
      %v43 = vcombine.high %v39, %v39
      %v45 = vunpack.c.l.s4 1983009808
      %v46 = vunpack.c.0.s8 %v45
      %v47 = vlaneseq
      %v48 = vshrl.u32 %v47, 7
      %v49 = vsub.s32 %v46, %v48
      %v50 = vrot.slane %v39, %v49
      %v52 = vunpack.c.l.s4 1983009808
      %v53 = vunpack.c.0.s8 %v52
      %v54 = vlaneseq
      %v55 = vshrl.u32 %v54, 7
      %v56 = vsub.s32 %v53, %v55
      %v57 = vrot.slane %v43, %v56
      %v58 = vcombine.high %v50, %v50
      %v59 = vcombine.high %v57, %v57
      %v60 = vcombine.high %v40, %v40
      %v62 = vunpack.c.l.s4 1983009808
      %v63 = vunpack.c.0.s8 %v62
      %v64 = vlaneseq
      %v65 = vshrl.u32 %v64, 7
      %v66 = vsub.s32 %v63, %v65
      %v67 = vrot.slane %v40, %v66
      %v69 = vunpack.c.l.s4 1983009808
      %v70 = vunpack.c.0.s8 %v69
      %v71 = vlaneseq
      %v72 = vshrl.u32 %v71, 7
      %v73 = vsub.s32 %v70, %v72
      %v74 = vrot.slane %v60, %v73
      %v75 = vcombine.high %v67, %v67
      %v76 = vcombine.high %v74, %v74
      %vm85 = vcmask 1041408
      %v86 = vsel %vm85, %v50, 0.0
      %v87 = vsel %vm85, %v58, 0.0
      %v88 = vadd.f32 %v86, %v87
      %v89 = vsel %vm85, %v57, 0.0
      %v90 = vadd.f32 %v88, %v89
      %v91 = vsel %vm85, %v59, 0.0
      %v92 = vadd.f32 %v90, %v91
      %v93 = vsel %vm85, %v67, 0.0
      %v94 = vadd.f32 %v92, %v93
      %v95 = vsel %vm85, %v75, 0.0
      %v96 = vadd.f32 %v94, %v95
      %v97 = vsel %vm85, %v74, 0.0
      %v98 = vadd.f32 %v96, %v97
      %v99 = vsel %vm85, %v76, 0.0
      %v100 = vadd.f32 %v98, %v99
      %101 = vadd.xlane.f32.xlu0 %v100
      %v102 = vpop.xlane.xlu0 %101
      %vm103 = vcmask 1024
      %104 = vst.msk [vmem:[%s1] sm:$0x3] %vm103, %v102
    $region17: #{tpu_custom_call.1} parent=1 // pred_fallthru
      _
    // Predicated region
    $region18: #{tpu_custom_call.1} parent=1 // pred_check
      _
    $region19: #{tpu_custom_call.1} parent=1 // pred_check_branch
      %106 = sbr.rel (0) target = $region21
    $region20: #{tpu_custom_call.1} parent=1 // pred_region
      _
    $region21: #{tpu_custom_call.1} parent=1 // pred_fallthru
      _
    // Predicated region
    $region22: #{tpu_custom_call.1} parent=1 // pred_check
      _
    $region23: #{tpu_custom_call.1} parent=1 // pred_check_branch
      %108 = sbr.rel (0) target = $region25
    $region24: #{tpu_custom_call.1} parent=1 // pred_region
      _
    $region25: #{tpu_custom_call.1} parent=1 // pred_fallthru
      _
    %109 = vsyncpa [#allocation4], 1

</llo_original>
